<compile_context>
chip_gen: v5e
topology: v5e:2x2
jax: 0.10.0
libtpu: 0.0.40
codegen_flags: <defaults>
</compile_context>

<pallas_src>
import jax
import jax.numpy as jnp
from jax.experimental import pallas as pl
from jax.experimental.pallas import tpu as pltpu


def geoposnet_kernel(x_ref, w1_ref, b1_ref, w2_ref, b2_ref, o_ref):
    # x_ref : (tr, pack*3)        lane-packed tile of rel_pos rows
    # w1_ref: (pack*3, pack*H)    block-diagonal first-layer weight (in, out)
    # b1_ref: (1, pack*H)
    # w2_ref: (pack*H, pack*H)    block-diagonal second-layer weight (in, out)
    # b2_ref: (1, pack*H)
    # o_ref : (tr, pack*H)        lane-dense output tile
    x = x_ref[...]
    w1 = w1_ref[...]
    tr = x.shape[0]
    p3 = x.shape[1]
    ph = w1.shape[1]

    # Layer 1 on the VPU: the contraction dim is tiny (3 per logical row), so a few
    # broadcast-FMAs beat pushing a K~3 operand through the MXU.
    acc = jnp.zeros((tr, ph), dtype=jnp.float32)
    for j in range(p3):
        acc = acc + x[:, j:j + 1].astype(jnp.float32) * w1[j:j + 1, :].astype(jnp.float32)
    h = jnp.maximum(acc + b1_ref[...], 0.0)  # ReLU

    # Layer 2 on the MXU: (tr, pack*H) @ (pack*H, pack*H) -> (tr,128)@(128,128) when packed.
    out = jnp.dot(h, w2_ref[...], preferred_element_type=jnp.float32) + b2_ref[...]
    o_ref[...] = out.astype(o_ref.dtype)


def geoposnet_forward(rel_pos, w1, b1, w2, b2, *, tm=2048):
    """rel_pos: (..., 3). Returns (..., hidden). w1:(3,H), w2:(H,H) stored as (in, out)."""
    hidden = w1.shape[1]
    lead_shape = rel_pos.shape[:-1]
    x = rel_pos.reshape(-1, 3)
    n = x.shape[0]

    # Lane-packing factor: write `pack` logical rows per 128-lane output row so stores
    # are unmasked/lane-dense when hidden < 128.
    if hidden < 128 and 128 % hidden == 0:
        pack = 128 // hidden
    else:
        pack = 1  # fallback: output last dim == hidden (may use masked stores)
    row_unit = pack * 8  # logical rows per sublane-aligned packed row-group

    # Big tiles amortize per-grid-step overhead; shrink for tiny inputs so a 16-row
    # problem is not padded to 2048 rows.
    tm_eff = max(row_unit, (tm // row_unit) * row_unit)
    tm_eff = min(tm_eff, pl.cdiv(n, row_unit) * row_unit)
    n_pad = pl.cdiv(n, tm_eff) * tm_eff
    if n_pad != n:
        x = jnp.pad(x, ((0, n_pad - n), (0, 0)))

    # Free row-major reshape + block-diagonal weights implement the packing:
    #   x_packed[r, p*3+d]   = x[r*pack + p, d]
    #   out_packed[r, p*H+c] = out[r*pack + p, c]
    xp = x.reshape(n_pad // pack, pack * 3)
    eye = jnp.eye(pack, dtype=w1.dtype)
    w1b = jnp.kron(eye, w1)                              # (pack*3, pack*H), block-diagonal
    w2b = jnp.kron(eye, w2)                              # (pack*H, pack*H), block-diagonal
    b1t = jnp.tile(b1, pack).reshape(1, pack * hidden)
    b2t = jnp.tile(b2, pack).reshape(1, pack * hidden)

    rows = n_pad // pack
    tr = tm_eff // pack
    ph = pack * hidden

    # Note: the weight/bias operands have constant index_maps so they are not re-DMA'd per
    # step; at large `hidden` they could additionally use pipeline_mode=pl.Buffered(1) to
    # halve their VMEM footprint (irrelevant at hidden=32, so omitted here).
    out = pl.pallas_call(
        geoposnet_kernel,
        out_shape=jax.ShapeDtypeStruct((rows, ph), rel_pos.dtype),
        grid_spec=pltpu.PrefetchScalarGridSpec(
            num_scalar_prefetch=0,
            grid=(rows // tr,),
            in_specs=[
                pl.BlockSpec((tr, pack * 3), lambda i: (i, 0)),   # x tile (lane-packed)
                pl.BlockSpec((pack * 3, ph), lambda i: (0, 0)),   # W1 block-diag (full)
                pl.BlockSpec((1, ph), lambda i: (0, 0)),          # b1 (full, tiled)
                pl.BlockSpec((ph, ph), lambda i: (0, 0)),         # W2 block-diag (full)
                pl.BlockSpec((1, ph), lambda i: (0, 0)),          # b2 (full, tiled)
            ],
            out_specs=pl.BlockSpec((tr, ph), lambda i: (i, 0)),
        ),
        compiler_params=pltpu.CompilerParams(
            dimension_semantics=("parallel",),        # lets v7x shard grid steps across TCs
            vmem_limit_bytes=32 * 1024 * 1024,        # headroom for large tm / hidden
        ),
    )(xp, w1b, b1t, w2b, b2t)

    out = out.reshape(n_pad, hidden)[:n]
    return out.reshape(*lead_shape, hidden)


def init_params(hidden_dim, key):
    """Deterministic init mimicking nn.Linear shapes.
    PyTorch stores W as (out, in); we keep (in, out) so the kernel does x @ W."""
    k1, k2, k3, k4 = jax.random.split(key, 4)
    w1 = jax.random.normal(k1, (3, hidden_dim), jnp.float32) * 0.1
    b1 = jax.random.normal(k2, (hidden_dim,), jnp.float32) * 0.1
    w2 = jax.random.normal(k3, (hidden_dim, hidden_dim), jnp.float32) * 0.1
    b2 = jax.random.normal(k4, (hidden_dim,), jnp.float32) * 0.1
    return w1, b1, w2, b2


if __name__ == "__main__":
    key = jax.random.PRNGKey(0)
    k_in, k_in2, k_par = jax.random.split(key, 3)

    hidden = 32
    w1, b1, w2, b2 = init_params(hidden, k_par)

    def ref_fn(rp):
        h_ref = jnp.maximum(rp @ w1 + b1, 0.0)
        return h_ref @ w2 + b2

    # Small shape consistent with the module's (..., 3) -> (..., hidden) contract.
    batch, seq = 2, 8
    rel_pos = jax.random.normal(k_in, (batch, seq, 3), jnp.float32)
    out = jax.block_until_ready(geoposnet_forward(rel_pos, w1, b1, w2, b2))
    assert out.shape == (batch, seq, hidden)
    assert jnp.allclose(out, ref_fn(rel_pos), atol=1e-4, rtol=1e-4), "mismatch vs reference (small)"

    # Ragged, multi-tile case: exercises padding + multi-step grid + lane packing.
    rel_pos2 = jax.random.normal(k_in2, (2, 1000, 3), jnp.float32)
    out2 = jax.block_until_ready(geoposnet_forward(rel_pos2, w1, b1, w2, b2, tm=512))
    assert out2.shape == (2, 1000, hidden)
    assert jnp.allclose(out2, ref_fn(rel_pos2), atol=1e-4, rtol=1e-4), "mismatch vs reference (ragged)"

    print("KERNEL_OK")
</pallas_src>

<mosaic_0001>
module attributes {stable_mosaic.version = 11 : i64} {
  func.func @geoposnet_kernel(%arg0: i32, %arg1: memref<8x12xf32, #tpu.memory_space<vmem>>, %arg2: memref<12x128xf32, #tpu.memory_space<vmem>>, %arg3: memref<1x128xf32, #tpu.memory_space<vmem>>, %arg4: memref<128x128xf32, #tpu.memory_space<vmem>>, %arg5: memref<1x128xf32, #tpu.memory_space<vmem>>, %arg6: memref<8x128xf32, #tpu.memory_space<vmem>>) attributes {dimension_semantics = [#tpu.dimension_semantics<parallel>], iteration_bounds = array<i64: 1>, scalar_prefetch = 0 : i64, scratch_operands = 0 : i64, tpu.core_type = #tpu.core_type<tc>, window_params = [{transform_indices = @transform_0, window_bounds = array<i64: 8, 12>}, {pipeline_mode = #tpu.pipeline_mode<synchronous>, transform_indices = @transform_1, window_bounds = array<i64: 12, 128>}, {pipeline_mode = #tpu.pipeline_mode<synchronous>, transform_indices = @transform_2, window_bounds = array<i64: 1, 128>}, {pipeline_mode = #tpu.pipeline_mode<synchronous>, transform_indices = @transform_3, window_bounds = array<i64: 128, 128>}, {pipeline_mode = #tpu.pipeline_mode<synchronous>, transform_indices = @transform_4, window_bounds = array<i64: 1, 128>}, {transform_indices = @transform_5, window_bounds = array<i64: 8, 128>}]} {
    %c0 = arith.constant 0 : index
    %c0_0 = arith.constant 0 : index
    %0 = vector.load %arg1[%c0, %c0_0] : memref<8x12xf32, #tpu.memory_space<vmem>>, vector<8x12xf32>
    %c0_1 = arith.constant 0 : index
    %c0_2 = arith.constant 0 : index
    %1 = vector.load %arg2[%c0_1, %c0_2] : memref<12x128xf32, #tpu.memory_space<vmem>>, vector<12x128xf32>
    %cst = arith.constant 0.000000e+00 : f32
    %2 = vector.broadcast %cst : f32 to vector<8x128xf32>
    %3 = vector.extract_strided_slice %0 {offsets = [0, 0], sizes = [8, 1], strides = [1, 1]} : vector<8x12xf32> to vector<8x1xf32>
    %4 = vector.extract_strided_slice %1 {offsets = [0, 0], sizes = [1, 128], strides = [1, 1]} : vector<12x128xf32> to vector<1x128xf32>
    %5 = vector.broadcast %3 : vector<8x1xf32> to vector<8x128xf32>
    %6 = vector.broadcast %4 : vector<1x128xf32> to vector<8x128xf32>
    %7 = arith.mulf %5, %6 : vector<8x128xf32>
    %8 = arith.addf %2, %7 : vector<8x128xf32>
    %9 = vector.extract_strided_slice %0 {offsets = [0, 1], sizes = [8, 1], strides = [1, 1]} : vector<8x12xf32> to vector<8x1xf32>
    %10 = vector.extract_strided_slice %1 {offsets = [1, 0], sizes = [1, 128], strides = [1, 1]} : vector<12x128xf32> to vector<1x128xf32>
    %11 = vector.broadcast %9 : vector<8x1xf32> to vector<8x128xf32>
    %12 = vector.broadcast %10 : vector<1x128xf32> to vector<8x128xf32>
    %13 = arith.mulf %11, %12 : vector<8x128xf32>
    %14 = arith.addf %8, %13 : vector<8x128xf32>
    %15 = vector.extract_strided_slice %0 {offsets = [0, 2], sizes = [8, 1], strides = [1, 1]} : vector<8x12xf32> to vector<8x1xf32>
    %16 = vector.extract_strided_slice %1 {offsets = [2, 0], sizes = [1, 128], strides = [1, 1]} : vector<12x128xf32> to vector<1x128xf32>
    %17 = vector.broadcast %15 : vector<8x1xf32> to vector<8x128xf32>
    %18 = vector.broadcast %16 : vector<1x128xf32> to vector<8x128xf32>
    %19 = arith.mulf %17, %18 : vector<8x128xf32>
    %20 = arith.addf %14, %19 : vector<8x128xf32>
    %21 = vector.extract_strided_slice %0 {offsets = [0, 3], sizes = [8, 1], strides = [1, 1]} : vector<8x12xf32> to vector<8x1xf32>
    %22 = vector.extract_strided_slice %1 {offsets = [3, 0], sizes = [1, 128], strides = [1, 1]} : vector<12x128xf32> to vector<1x128xf32>
    %23 = vector.broadcast %21 : vector<8x1xf32> to vector<8x128xf32>
    %24 = vector.broadcast %22 : vector<1x128xf32> to vector<8x128xf32>
    %25 = arith.mulf %23, %24 : vector<8x128xf32>
    %26 = arith.addf %20, %25 : vector<8x128xf32>
    %27 = vector.extract_strided_slice %0 {offsets = [0, 4], sizes = [8, 1], strides = [1, 1]} : vector<8x12xf32> to vector<8x1xf32>
    %28 = vector.extract_strided_slice %1 {offsets = [4, 0], sizes = [1, 128], strides = [1, 1]} : vector<12x128xf32> to vector<1x128xf32>
    %29 = vector.broadcast %27 : vector<8x1xf32> to vector<8x128xf32>
    %30 = vector.broadcast %28 : vector<1x128xf32> to vector<8x128xf32>
    %31 = arith.mulf %29, %30 : vector<8x128xf32>
    %32 = arith.addf %26, %31 : vector<8x128xf32>
    %33 = vector.extract_strided_slice %0 {offsets = [0, 5], sizes = [8, 1], strides = [1, 1]} : vector<8x12xf32> to vector<8x1xf32>
    %34 = vector.extract_strided_slice %1 {offsets = [5, 0], sizes = [1, 128], strides = [1, 1]} : vector<12x128xf32> to vector<1x128xf32>
    %35 = vector.broadcast %33 : vector<8x1xf32> to vector<8x128xf32>
    %36 = vector.broadcast %34 : vector<1x128xf32> to vector<8x128xf32>
    %37 = arith.mulf %35, %36 : vector<8x128xf32>
    %38 = arith.addf %32, %37 : vector<8x128xf32>
    %39 = vector.extract_strided_slice %0 {offsets = [0, 6], sizes = [8, 1], strides = [1, 1]} : vector<8x12xf32> to vector<8x1xf32>
    %40 = vector.extract_strided_slice %1 {offsets = [6, 0], sizes = [1, 128], strides = [1, 1]} : vector<12x128xf32> to vector<1x128xf32>
    %41 = vector.broadcast %39 : vector<8x1xf32> to vector<8x128xf32>
    %42 = vector.broadcast %40 : vector<1x128xf32> to vector<8x128xf32>
    %43 = arith.mulf %41, %42 : vector<8x128xf32>
    %44 = arith.addf %38, %43 : vector<8x128xf32>
    %45 = vector.extract_strided_slice %0 {offsets = [0, 7], sizes = [8, 1], strides = [1, 1]} : vector<8x12xf32> to vector<8x1xf32>
    %46 = vector.extract_strided_slice %1 {offsets = [7, 0], sizes = [1, 128], strides = [1, 1]} : vector<12x128xf32> to vector<1x128xf32>
    %47 = vector.broadcast %45 : vector<8x1xf32> to vector<8x128xf32>
    %48 = vector.broadcast %46 : vector<1x128xf32> to vector<8x128xf32>
    %49 = arith.mulf %47, %48 : vector<8x128xf32>
    %50 = arith.addf %44, %49 : vector<8x128xf32>
    %51 = vector.extract_strided_slice %0 {offsets = [0, 8], sizes = [8, 1], strides = [1, 1]} : vector<8x12xf32> to vector<8x1xf32>
    %52 = vector.extract_strided_slice %1 {offsets = [8, 0], sizes = [1, 128], strides = [1, 1]} : vector<12x128xf32> to vector<1x128xf32>
    %53 = vector.broadcast %51 : vector<8x1xf32> to vector<8x128xf32>
    %54 = vector.broadcast %52 : vector<1x128xf32> to vector<8x128xf32>
    %55 = arith.mulf %53, %54 : vector<8x128xf32>
    %56 = arith.addf %50, %55 : vector<8x128xf32>
    %57 = vector.extract_strided_slice %0 {offsets = [0, 9], sizes = [8, 1], strides = [1, 1]} : vector<8x12xf32> to vector<8x1xf32>
    %58 = vector.extract_strided_slice %1 {offsets = [9, 0], sizes = [1, 128], strides = [1, 1]} : vector<12x128xf32> to vector<1x128xf32>
    %59 = vector.broadcast %57 : vector<8x1xf32> to vector<8x128xf32>
    %60 = vector.broadcast %58 : vector<1x128xf32> to vector<8x128xf32>
    %61 = arith.mulf %59, %60 : vector<8x128xf32>
    %62 = arith.addf %56, %61 : vector<8x128xf32>
    %63 = vector.extract_strided_slice %0 {offsets = [0, 10], sizes = [8, 1], strides = [1, 1]} : vector<8x12xf32> to vector<8x1xf32>
    %64 = vector.extract_strided_slice %1 {offsets = [10, 0], sizes = [1, 128], strides = [1, 1]} : vector<12x128xf32> to vector<1x128xf32>
    %65 = vector.broadcast %63 : vector<8x1xf32> to vector<8x128xf32>
    %66 = vector.broadcast %64 : vector<1x128xf32> to vector<8x128xf32>
    %67 = arith.mulf %65, %66 : vector<8x128xf32>
    %68 = arith.addf %62, %67 : vector<8x128xf32>
    %69 = vector.extract_strided_slice %0 {offsets = [0, 11], sizes = [8, 1], strides = [1, 1]} : vector<8x12xf32> to vector<8x1xf32>
    %70 = vector.extract_strided_slice %1 {offsets = [11, 0], sizes = [1, 128], strides = [1, 1]} : vector<12x128xf32> to vector<1x128xf32>
    %71 = vector.broadcast %69 : vector<8x1xf32> to vector<8x128xf32>
    %72 = vector.broadcast %70 : vector<1x128xf32> to vector<8x128xf32>
    %73 = arith.mulf %71, %72 : vector<8x128xf32>
    %74 = arith.addf %68, %73 : vector<8x128xf32>
    %c0_3 = arith.constant 0 : index
    %c0_4 = arith.constant 0 : index
    %75 = vector.load %arg3[%c0_3, %c0_4] : memref<1x128xf32, #tpu.memory_space<vmem>>, vector<1x128xf32>
    %76 = vector.broadcast %75 : vector<1x128xf32> to vector<8x128xf32>
    %77 = arith.addf %74, %76 : vector<8x128xf32>
    %cst_5 = arith.constant 0.000000e+00 : f32
    %78 = vector.broadcast %cst_5 : f32 to vector<8x128xf32>
    %79 = arith.maximumf %77, %78 : vector<8x128xf32>
    %c0_6 = arith.constant 0 : index
    %c0_7 = arith.constant 0 : index
    %80 = vector.load %arg4[%c0_6, %c0_7] : memref<128x128xf32, #tpu.memory_space<vmem>>, vector<128x128xf32>
    %cst_8 = arith.constant dense<0.000000e+00> : vector<8x128xf32>
    %81 = tpu.matmul %79, %80, %cst_8 {dimension_numbers = #tpu.dot_dimension_numbers<[1], [0], [0], [1], [0, 0, 1, 1], [], []>} : vector<8x128xf32>, vector<128x128xf32>, vector<8x128xf32> -> vector<8x128xf32>
    %c0_9 = arith.constant 0 : index
    %c0_10 = arith.constant 0 : index
    %82 = vector.load %arg5[%c0_9, %c0_10] : memref<1x128xf32, #tpu.memory_space<vmem>>, vector<1x128xf32>
    %83 = vector.broadcast %82 : vector<1x128xf32> to vector<8x128xf32>
    %84 = arith.addf %81, %83 : vector<8x128xf32>
    %c0_11 = arith.constant 0 : index
    %c0_12 = arith.constant 0 : index
    %85 = vector.load %arg6[%c0_11, %c0_12] : memref<8x128xf32, #tpu.memory_space<vmem>>, vector<8x128xf32>
    tpu.vector_store %arg6[%c0_11, %c0_12], %84 {strides = array<i32>} : memref<8x128xf32, #tpu.memory_space<vmem>>, vector<8x128xf32>,
    return
  }
  func.func @transform_0(%arg0: i32) -> (i32, i32) {
    %c0_i32 = arith.constant 0 : i32
    %c0_i32_0 = arith.constant 0 : i32
    return %arg0, %c0_i32 : i32, i32
  }
  func.func @transform_1(%arg0: i32) -> (i32, i32) {
    %c0_i32 = arith.constant 0 : i32
    %c0_i32_0 = arith.constant 0 : i32
    %c0_i32_1 = arith.constant 0 : i32
    return %c0_i32, %c0_i32_0 : i32, i32
  }
  func.func @transform_2(%arg0: i32) -> (i32, i32) {
    %c0_i32 = arith.constant 0 : i32
    %c0_i32_0 = arith.constant 0 : i32
    %c0_i32_1 = arith.constant 0 : i32
    return %c0_i32, %c0_i32_0 : i32, i32
  }
  func.func @transform_3(%arg0: i32) -> (i32, i32) {
    %c0_i32 = arith.constant 0 : i32
    %c0_i32_0 = arith.constant 0 : i32
    %c0_i32_1 = arith.constant 0 : i32
    return %c0_i32, %c0_i32_0 : i32, i32
  }
  func.func @transform_4(%arg0: i32) -> (i32, i32) {
    %c0_i32 = arith.constant 0 : i32
    %c0_i32_0 = arith.constant 0 : i32
    %c0_i32_1 = arith.constant 0 : i32
    return %c0_i32, %c0_i32_0 : i32, i32
  }
  func.func @transform_5(%arg0: i32) -> (i32, i32) {
    %c0_i32 = arith.constant 0 : i32
    %c0_i32_0 = arith.constant 0 : i32
    return %arg0, %c0_i32 : i32, i32
  }
}

</mosaic_0001>

<llo_original>
// kernel: tpu_custom_call.1
$region0: #{tpu_custom_call.1}
  #allocation0 [shape = 'u32[]', space=smem, size = 0x4, offset = 0x4, fixed_abs, tag = 'smem constant byte address 0x4 - core index']
  #allocation1 [shape = 'u32[72,128]{1,0:T(1,128)}', space=vmem, size = 0x9000, scoped, tag = 'internal scratch']
  %s0 = inlined_call_operand.hbm [shape: f32[8,12], index: 0, kind: input, shape index: {}]
  %s1 = inlined_call_operand.hbm [shape: f32[12,128], index: 1, kind: input, shape index: {}]
  %s2 = inlined_call_operand.vmem [shape: f32[1,128], index: 2, kind: input, shape index: {}]
  %s3 = inlined_call_operand.hbm [shape: f32[128,128], index: 3, kind: input, shape index: {}]
  %s4 = inlined_call_operand.vmem [shape: f32[1,128], index: 4, kind: input, shape index: {}]
  %s5 = inlined_call_operand.hbm [shape: f32[8,128], index: 5, kind: output, shape index: {}]
  %s6 = sld [smem:[#allocation0]]
  $region42: #{tpu_custom_call.1} parent=0
    _
  %s8 = ssub.s32 1, %s6
  %s9 = scalar_select 0, %s8, %s6
  $region1: #{tpu_custom_call.1} parent=0
    #allocation2 [shape = 'u8[4096]{0}', space=vmem, size = 0x1000, scoped, tag = 'input window, operand 0, single buffered']
    #allocation3 [shape = 's32[1]{0}', space=sflag, size = 0x4, scoped, tag = 'scoped memory for tpu_custom_call.1']
    #allocation4 [shape = 's32[1]{0}', space=sflag, size = 0x4, scoped, tag = 'scoped memory for tpu_custom_call.1']
    #allocation5 [shape = 'u8[8192]{0}', space=vmem, size = 0x2000, scoped, tag = 'input window, operand 1, single buffered']
    #allocation6 [shape = 's32[1]{0}', space=sflag, size = 0x4, scoped, tag = 'scoped memory for tpu_custom_call.1']
    #allocation7 [shape = 'u8[65536]{0}', space=vmem, size = 0x10000, scoped, tag = 'input window, operand 3, single buffered']
    #allocation8 [shape = 'u8[4096]{0}', space=vmem, size = 0x1000, scoped, tag = 'output window, operand 0, single buffered']
    %10 = vsyncpa [#allocation3], 0
    %11 = vsyncpa [#allocation6], 0
    %12 = vsyncpa [#allocation4], 0
    // Predicated region
    $region2: #{tpu_custom_call.1} parent=1 // pred_check
      _
    $region3: #{tpu_custom_call.1} parent=1 // pred_check_branch
      %14 = sbr.rel (0) target = $region5
    $region4: #{tpu_custom_call.1} parent=1 // pred_region
      %16 = vsyncadd [#allocation3], 0
      %s18 = sshll.u32 %s0, 4
      %s19 = int_to_ptr.hbm [resolvable:$true] %s18
      %s20 = sshll.u32 [#allocation2], 4
      %s21 = int_to_ptr.vmem [resolvable:$true] %s20
      %23 = dma.hbm_to_vmem [thread:$0]  %s19, 128, %s21, [#allocation3]
    $region5: #{tpu_custom_call.1} parent=1 // pred_fallthru
      _
    // Predicated region
    $region6: #{tpu_custom_call.1} parent=1 // pred_check
      _
    $region7: #{tpu_custom_call.1} parent=1 // pred_check_branch
      %25 = sbr.rel (0) target = $region9
    $region8: #{tpu_custom_call.1} parent=1 // pred_region
      %27 = vsyncadd [#allocation6], 0
      %s28 = sshll.u32 %s1, 4
      %s29 = int_to_ptr.hbm [resolvable:$true] %s28
      %s30 = sshll.u32 [#allocation5], 4
      %s31 = int_to_ptr.vmem [resolvable:$true] %s30
      %36 = dma.hbm_to_vmem [thread:$0]  %s29, 256, %s31, [#allocation6], 128, 128, 8
    $region9: #{tpu_custom_call.1} parent=1 // pred_fallthru
      _
    // Predicated region
    $region10: #{tpu_custom_call.1} parent=1 // pred_check
      _
    $region11: #{tpu_custom_call.1} parent=1 // pred_check_branch
      %38 = sbr.rel (0) target = $region13
    $region12: #{tpu_custom_call.1} parent=1 // pred_region
      _
    $region13: #{tpu_custom_call.1} parent=1 // pred_fallthru
      _
    // Predicated region
    $region14: #{tpu_custom_call.1} parent=1 // pred_check
      _
    $region15: #{tpu_custom_call.1} parent=1 // pred_check_branch
      %40 = sbr.rel (0) target = $region17
    $region16: #{tpu_custom_call.1} parent=1 // pred_region
      %42 = vsyncadd [#allocation6], 0
      %s43 = sshll.u32 %s3, 4
      %s44 = int_to_ptr.hbm [resolvable:$true] %s43
      %s45 = sshll.u32 [#allocation7], 4
      %s46 = int_to_ptr.vmem [resolvable:$true] %s45
      %51 = dma.hbm_to_vmem [thread:$0]  %s44, 2048, %s46, [#allocation6], 128, 128, 8
    $region17: #{tpu_custom_call.1} parent=1 // pred_fallthru
      _
    // Predicated region
    $region18: #{tpu_custom_call.1} parent=1 // pred_check
      _
    $region19: #{tpu_custom_call.1} parent=1 // pred_check_branch
      %53 = sbr.rel (0) target = $region21
    $region20: #{tpu_custom_call.1} parent=1 // pred_region
      _
    $region21: #{tpu_custom_call.1} parent=1 // pred_fallthru
      _
    // Predicated region
    $region22: #{tpu_custom_call.1} parent=1 // pred_check
      _
    $region23: #{tpu_custom_call.1} parent=1 // pred_check_branch
      %55 = sbr.rel (0) target = $region25
    $region24: #{tpu_custom_call.1} parent=1 // pred_region
      %57 = dma.done [#allocation3], 128
    $region25: #{tpu_custom_call.1} parent=1 // pred_fallthru
      _
    // Predicated region
    $region26: #{tpu_custom_call.1} parent=1 // pred_check
      _
    $region27: #{tpu_custom_call.1} parent=1 // pred_check_branch
      %59 = sbr.rel (0) target = $region29
    $region28: #{tpu_custom_call.1} parent=1 // pred_region
      %61 = dma.done [#allocation6], 256
    $region29: #{tpu_custom_call.1} parent=1 // pred_fallthru
      _
    // Predicated region
    $region30: #{tpu_custom_call.1} parent=1 // pred_check
      _
    $region31: #{tpu_custom_call.1} parent=1 // pred_check_branch
      %63 = sbr.rel (0) target = $region33
    $region32: #{tpu_custom_call.1} parent=1 // pred_region
      %65 = dma.done [#allocation6], 2048
    $region33: #{tpu_custom_call.1} parent=1 // pred_fallthru
      _
    %v66 = vld [vmem:[#allocation2] sm:$0xff]
    %v67 = vld [vmem:[#allocation5] sm:$0xff]
    %v68 = vld [vmem:[#allocation5 + $0x8] sm:$0xf]
    %70 = vset.pattern.permute.xlu0 0
    %71 = vperm.xlu0 %70, %v66
    %v72 = vpop.permute.xlu0 %71
    %v74 = vperm.slane %v67, 0
    %v75 = vmul.f32 %v72, %v74
    %v76 = vadd.f32 %v75, 0.0
    %77 = vset.pattern.permute.xlu0 1
    %78 = vperm.xlu0 %77, %v66
    %v79 = vpop.permute.xlu0 %78
    %v81 = vperm.slane %v67, 1
    %v82 = vmul.f32 %v79, %v81
    %v83 = vadd.f32 %v76, %v82
    %84 = vset.pattern.permute.xlu0 2
    %85 = vperm.xlu0 %84, %v66
    %v86 = vpop.permute.xlu0 %85
    %v88 = vperm.slane %v67, 2
    %v89 = vmul.f32 %v86, %v88
    %v90 = vadd.f32 %v83, %v89
    %91 = vset.pattern.permute.xlu0 3
    %92 = vperm.xlu0 %91, %v66
    %v93 = vpop.permute.xlu0 %92
    %v95 = vperm.slane %v67, 3
    %v96 = vmul.f32 %v93, %v95
    %v97 = vadd.f32 %v90, %v96
    %98 = vset.pattern.permute.xlu0 4
    %99 = vperm.xlu0 %98, %v66
    %v100 = vpop.permute.xlu0 %99
    %v102 = vperm.slane %v67, 4
    %v103 = vmul.f32 %v100, %v102
    %v104 = vadd.f32 %v97, %v103
    %105 = vset.pattern.permute.xlu0 5
    %106 = vperm.xlu0 %105, %v66
    %v107 = vpop.permute.xlu0 %106
    %v109 = vperm.slane %v67, 5
    %v110 = vmul.f32 %v107, %v109
    %v111 = vadd.f32 %v104, %v110
    %112 = vset.pattern.permute.xlu0 6
    %113 = vperm.xlu0 %112, %v66
    %v114 = vpop.permute.xlu0 %113
    %v116 = vperm.slane %v67, 6
    %v117 = vmul.f32 %v114, %v116
    %v118 = vadd.f32 %v111, %v117
    %119 = vset.pattern.permute.xlu0 7
    %120 = vperm.xlu0 %119, %v66
    %v121 = vpop.permute.xlu0 %120
    %v123 = vperm.slane %v67, 7
    %v124 = vmul.f32 %v121, %v123
    %v125 = vadd.f32 %v118, %v124
    %126 = vset.pattern.permute.xlu0 8
    %127 = vperm.xlu0 %126, %v66
    %v128 = vpop.permute.xlu0 %127
    %v130 = vperm.slane %v68, 0
    %v131 = vmul.f32 %v128, %v130
    %v132 = vadd.f32 %v125, %v131
    %133 = vset.pattern.permute.xlu0 9
    %134 = vperm.xlu0 %133, %v66
    %v135 = vpop.permute.xlu0 %134
    %v137 = vperm.slane %v68, 1
    %v138 = vmul.f32 %v135, %v137
    %v139 = vadd.f32 %v132, %v138
    %140 = vset.pattern.permute.xlu0 10
    %141 = vperm.xlu0 %140, %v66
    %v142 = vpop.permute.xlu0 %141
    %v144 = vperm.slane %v68, 2
    %v145 = vmul.f32 %v142, %v144
    %v146 = vadd.f32 %v139, %v145
    %147 = vset.pattern.permute.xlu0 11
    %148 = vperm.xlu0 %147, %v66
    %v149 = vpop.permute.xlu0 %148
    %v151 = vperm.slane %v68, 3
    %v152 = vmul.f32 %v149, %v151
    %v153 = vadd.f32 %v146, %v152
    %v154 = vld [vmem:[%s2] sm:$0x1]
    %v156 = vperm.slane %v154, 0
    %v158 = vadd.f32 %v153, %v156
    %v159 = vmax.f32 %v158, 0.0
    %v160 = vld [vmem:[#allocation7] sm:$0xff]
    %v161 = vld [vmem:[#allocation7 + $0x8] sm:$0xff]
    %v162 = vld [vmem:[#allocation7 + $0x10] sm:$0xff]
    %v163 = vld [vmem:[#allocation7 + $0x18] sm:$0xff]
    %v164 = vld [vmem:[#allocation7 + $0x20] sm:$0xff]
    %v165 = vld [vmem:[#allocation7 + $0x28] sm:$0xff]
    %v166 = vld [vmem:[#allocation7 + $0x30] sm:$0xff]
    %v167 = vld [vmem:[#allocation7 + $0x38] sm:$0xff]
    %v168 = vld [vmem:[#allocation7 + $0x40] sm:$0xff]
    %v169 = vld [vmem:[#allocation7 + $0x48] sm:$0xff]
    %v170 = vld [vmem:[#allocation7 + $0x50] sm:$0xff]
    %v171 = vld [vmem:[#allocation7 + $0x58] sm:$0xff]
    %v172 = vld [vmem:[#allocation7 + $0x60] sm:$0xff]
    %v173 = vld [vmem:[#allocation7 + $0x68] sm:$0xff]
    %v174 = vld [vmem:[#allocation7 + $0x70] sm:$0xff]
    %v175 = vld [vmem:[#allocation7 + $0x78] sm:$0xff]
    %v176 = vld [vmem:[%s4] sm:$0x1]
    %v178 = vperm.slane %v176, 0
    %180 = vmatpush.msra.mxu0 %v175
    %181 = vmatpush.msra.mxu0 %v174
    %182 = vmatpush.msra.mxu0 %v173
    %183 = vmatpush.msra.mxu0 %v172
    %184 = vmatpush.msra.mxu0 %v171
    %185 = vmatpush.msra.mxu0 %v170
    %186 = vmatpush.msra.mxu0 %v169
    %187 = vmatpush.msra.mxu0 %v168
    %188 = vmatpush.msra.mxu0 %v167
    %189 = vmatpush.msra.mxu0 %v166
    %190 = vmatpush.msra.mxu0 %v165
    %191 = vmatpush.msra.mxu0 %v164
    %192 = vmatpush.msra.mxu0 %v163
    %193 = vmatpush.msra.mxu0 %v162
    %194 = vmatpush.msra.mxu0 %v161
    %195 = vmatpush.msra.mxu0 %v160
    %196 = vmatmul.f32.gmra.mxu0 %v159
    %v197 = vpop.f32.mrf.mxu0
    %v198 = vadd.f32 %v178, %v197
    %199 = vdwg.mxu0
    %200 = vst [vmem:[#allocation8] sm:$0xff] %v198
    // Predicated region
    $region34: #{tpu_custom_call.1} parent=1 // pred_check
      _
    $region35: #{tpu_custom_call.1} parent=1 // pred_check_branch
      %202 = sbr.rel (0) target = $region37
    $region36: #{tpu_custom_call.1} parent=1 // pred_region
      %204 = vsyncadd [#allocation4], 0
      %s206 = sshll.u32 [#allocation8], 4
      %s207 = int_to_ptr.vmem [resolvable:$true] %s206
      %s208 = sshll.u32 %s5, 4
      %s209 = int_to_ptr.hbm [resolvable:$true] %s208
      %211 = dma.vmem_to_hbm [thread:$0]  %s207, 128, %s209, [#allocation4]
    $region37: #{tpu_custom_call.1} parent=1 // pred_fallthru
      _
    // Predicated region
    $region38: #{tpu_custom_call.1} parent=1 // pred_check
      _
    $region39: #{tpu_custom_call.1} parent=1 // pred_check_branch
      %213 = sbr.rel (0) target = $region41
    $region40: #{tpu_custom_call.1} parent=1 // pred_region
      %215 = dma.done [#allocation4], 128
    $region41: #{tpu_custom_call.1} parent=1 // pred_fallthru
      _
    %216 = vsyncpa [#allocation3], 1
    %217 = vsyncpa [#allocation6], 1
    %218 = vsyncpa [#allocation4], 1

</llo_original>
